<compile_context>
chip_gen: v7x
topology: tpu7x:2x2x1
jax: 0.10.0
libtpu: 0.0.40
codegen_flags: <defaults>
</compile_context>

<pallas_src>
import jax
import jax.numpy as jnp
from jax.experimental import pallas as pl
from jax.experimental.pallas import tpu as pltpu


def ctc_head_kernel(x_ref, w_ref, b_ref, out_ref):
    """Fused (folded encoder+ctc) linear + bias -> log_softmax(dim=-1).

    x_ref:   (TM, F)   bf16 input feature rows
    w_ref:   (F, Vp)   bf16 folded weight (w_enc @ w_ctc), vocab padded to 128x
    b_ref:   (1, Vp)   f32 bias (-1e30 on padded vocab lanes)
    out_ref: (TM, V)   log-probabilities (f32 or bf16), true vocab width
    """
    # Single MXU matmul, f32 accumulation.
    logits = jnp.dot(x_ref[...], w_ref[...], preferred_element_type=jnp.float32)
    logits = logits + b_ref[...]  # (1, Vp) broadcasts over rows

    # LogSoftmax along the vocab (lane) axis, all math in f32.  Padded vocab
    # lanes carry a -1e30 bias, so exp() contributes ~0 to the normalizer.
    m = jnp.max(logits, axis=-1, keepdims=True)
    z = logits - m
    lse = jnp.log(jnp.sum(jnp.exp(z), axis=-1, keepdims=True))
    y = z - lse
    # Store only the true vocab columns (drops the padded-lane garbage).
    out_ref[...] = y[:, : out_ref.shape[-1]].astype(out_ref.dtype)


def fold_ctc_params(w_enc, w_ctc, b_ctc):
    """One-time parameter prep (do at checkpoint-load time, NOT per forward).

    Folds the synthetic encoder projection into the ctc Linear (exact -- no
    nonlinearity in between), casts the MXU operands to bf16, and pads the
    vocab axis to a lane-dense multiple of 128 (padded classes get a -1e30
    bias so the softmax normalizer is untouched).
    """
    V = w_ctc.shape[1]
    v_p = 128 * pl.cdiv(V, 128)
    w_fold = (w_enc.astype(jnp.float32) @ w_ctc.astype(jnp.float32)).astype(
        jnp.bfloat16
    )
    b_pad = b_ctc.astype(jnp.float32).reshape(1, V)
    if v_p != V:
        w_fold = jnp.pad(w_fold, ((0, 0), (0, v_p - V)))
        b_pad = jnp.pad(b_pad, ((0, 0), (0, v_p - V)), constant_values=-1e30)
    return w_fold, b_pad, V


def _round_up(x, m):
    return ((x + m - 1) // m) * m


def ctc_model_forward(x, x_lens, w_fold, b_pad, vocab_size, *,
                      tile_m=512, out_dtype=jnp.float32):
    """Returns (ctc_log_probs, x_lens, num_frames).

    x:          (N, T, F) float32 features
    x_lens:     (N,) int32 valid frame counts
    w_fold:     (F, Vp) bf16 folded weight from fold_ctc_params
    b_pad:      (1, Vp) f32 padded bias from fold_ctc_params
    vocab_size: true V (<= Vp)
    out_dtype:  jnp.float32 (module-exact) or jnp.bfloat16 (halves the HBM
                writeback that dominates this kernel; softmax math stays f32).
    """
    N, T, F = x.shape
    Fw, v_p = w_fold.shape
    assert Fw == F, (Fw, F)
    V = vocab_size

    # Dropout(p=0.1) -> identity (eval mode).  MXU operands in bf16.
    x_2d = x.reshape(N * T, F).astype(jnp.bfloat16)
    rows = N * T

    # ---- Adaptive row tile.  No wrapper padding and no output slice: the
    # ragged tail block (if any) is handled by Pallas.  Tail-input garbage
    # only produces garbage in out-of-range rows whose output writes Pallas
    # masks off; rows are fully independent so valid rows are untouched.
    if rows <= tile_m:
        # Small problem: don't waste MXU/EUP/store work on padding, and keep
        # at least two grid steps when possible so v7x's two TensorCores both
        # get work through dimension_semantics=("parallel",).
        tile_m = rows if rows < 16 else _round_up(pl.cdiv(rows, 2), 8)

    # ---- Cap tile_m by a VMEM budget that also fits v7x (64 MiB physical).
    out_bytes = jnp.dtype(out_dtype).itemsize

    def footprint(tm):
        return (2 * tm * F * 2              # x tile (bf16, double-buffered)
                + 2 * tm * v_p * out_bytes  # out tile (double-buffered)
                + 2 * F * v_p * 2           # folded weight (worst case 2 bufs)
                + 2 * v_p * 4)              # bias

    budget = 40 * 1024 * 1024
    while tile_m > 8 and footprint(tile_m) > budget:
        tile_m //= 2
    vmem_limit = int(min(48 * 1024 * 1024,
                         max(32 * 1024 * 1024, 2 * footprint(tile_m))))

    num_tiles = pl.cdiv(rows, tile_m)

    cost = pl.CostEstimate(
        flops=2 * rows * F * v_p + 5 * rows * v_p,
        transcendentals=rows * v_p,           # exp (per-row log is negligible)
        bytes_accessed=(rows * F * 2          # x (bf16)
                        + F * v_p * 2         # folded weight (bf16)
                        + v_p * 4             # bias (f32)
                        + rows * V * out_bytes),  # log-prob output
    )

    def run(single_buffer_invariants):
        # Grid-invariant weight/bias: single-buffer to reclaim VMEM (matters
        # for realistic F x Vp on v7x's 64 MiB); harmless no-op at small sizes.
        inv_kw = ({"pipeline_mode": pl.Buffered(1)}
                  if single_buffer_invariants else {})
        return pl.pallas_call(
            ctc_head_kernel,
            out_shape=jax.ShapeDtypeStruct((rows, V), out_dtype),
            grid_spec=pltpu.PrefetchScalarGridSpec(
                num_scalar_prefetch=0,
                grid=(num_tiles,),
                in_specs=[
                    pl.BlockSpec((tile_m, F), lambda i: (i, 0)),
                    pl.BlockSpec((F, v_p), lambda i: (0, 0), **inv_kw),
                    pl.BlockSpec((1, v_p), lambda i: (0, 0), **inv_kw),
                ],
                out_specs=pl.BlockSpec((tile_m, V), lambda i: (i, 0)),
            ),
            compiler_params=pltpu.CompilerParams(
                # Row tiles are independent -> megacore/2-TC sharding.
                dimension_semantics=("parallel",),
                vmem_limit_bytes=vmem_limit,
            ),
            cost_estimate=cost,
        )(x_2d, w_fold, b_pad)

    try:
        out_2d = run(True)
    except Exception:
        # Installed JAX rejected pipeline_mode=pl.Buffered(1); fall back to
        # default double-buffering (only a VMEM-headroom loss, not a bug).
        out_2d = run(False)

    ctc_log_probs = out_2d.reshape(N, T, V)

    # num_frames = supervision_segments[:, 2].sum()  -> sum of valid lengths.
    num_frames = jnp.sum(x_lens)

    return ctc_log_probs, x_lens, num_frames


if __name__ == "__main__":
    # Small, deterministic shapes consistent with the module's forward:
    # x: (N, T, C) features; encoder_dim = 32; vocab_size = 128.
    N, T, F = 2, 8, 32
    E, V = 32, 128

    key = jax.random.PRNGKey(0)
    k_x, k_we, k_wc, k_bc = jax.random.split(key, 4)

    x = jax.random.normal(k_x, (N, T, F), dtype=jnp.float32)
    x_lens = jnp.array([T, T - 2], dtype=jnp.int32)

    # Deterministic parameter init (synthetic, not a checkpoint load).
    w_enc = jax.random.normal(k_we, (F, E), dtype=jnp.float32) * (1.0 / F**0.5)
    w_ctc = jax.random.normal(k_wc, (E, V), dtype=jnp.float32) * (1.0 / E**0.5)
    b_ctc = jax.random.normal(k_bc, (V,), dtype=jnp.float32) * 0.01

    # One-time parameter prep (cache this alongside the checkpoint).
    w_fold, b_pad, vocab = fold_ctc_params(w_enc, w_ctc, b_ctc)

    ctc_log_probs, out_lens, num_frames = ctc_model_forward(
        x, x_lens, w_fold, b_pad, vocab
    )
    jax.block_until_ready(ctc_log_probs)

    assert ctc_log_probs.shape == (N, T, V), ctc_log_probs.shape
    assert int(num_frames) == int(x_lens.sum()), num_frames

    # Sanity: rows of a log-softmax must sum (in prob space) to ~1.
    row_sums = jnp.exp(ctc_log_probs.astype(jnp.float32)).sum(-1)
    assert jnp.allclose(row_sums, 1.0, atol=1e-3), row_sums

    # Tight check: pure-JAX reference mirroring the kernel's bf16 operands.
    xb = x.reshape(-1, F).astype(jnp.bfloat16)
    wb = (w_enc @ w_ctc).astype(jnp.bfloat16)
    ref_b = jax.nn.log_softmax(
        jnp.dot(xb, wb, preferred_element_type=jnp.float32) + b_ctc, axis=-1
    )
    got = ctc_log_probs.reshape(-1, V).astype(jnp.float32)
    err_b = jnp.max(jnp.abs(got - ref_b))
    assert jnp.allclose(got, ref_b, atol=5e-3), err_b

    # Loose check: full-f32 unfused module semantics (fold + bf16 are the only
    # approximations, both well inside this tolerance).
    ref_f = jax.nn.log_softmax(x.reshape(-1, F) @ w_enc @ w_ctc + b_ctc, axis=-1)
    err_f = jnp.max(jnp.abs(got - ref_f))
    assert jnp.allclose(got, ref_f, atol=5e-2), err_f

    print("KERNEL_OK")
</pallas_src>

<mosaic_0001>
module attributes {stable_mosaic.version = 11 : i64} {
  func.func @ctc_head_kernel(%arg0: i32, %arg1: memref<8x32xbf16, #tpu.memory_space<vmem>>, %arg2: memref<32x128xbf16, #tpu.memory_space<vmem>>, %arg3: memref<1x128xf32, #tpu.memory_space<vmem>>, %arg4: memref<8x128xf32, #tpu.memory_space<vmem>>) attributes {dimension_semantics = [#tpu.dimension_semantics<parallel>], iteration_bounds = array<i64: 2>, scalar_prefetch = 0 : i64, scratch_operands = 0 : i64, tpu.core_type = #tpu.core_type<tc>, window_params = [{transform_indices = @transform_0, window_bounds = array<i64: 8, 32>}, {pipeline_mode = #tpu.pipeline_mode<synchronous>, transform_indices = @transform_1, window_bounds = array<i64: 32, 128>}, {pipeline_mode = #tpu.pipeline_mode<synchronous>, transform_indices = @transform_2, window_bounds = array<i64: 1, 128>}, {transform_indices = @transform_3, window_bounds = array<i64: 8, 128>}]} {
    %c0 = arith.constant 0 : index
    %c0_0 = arith.constant 0 : index
    %0 = vector.load %arg1[%c0, %c0_0] : memref<8x32xbf16, #tpu.memory_space<vmem>>, vector<8x32xbf16>
    %c0_1 = arith.constant 0 : index
    %c0_2 = arith.constant 0 : index
    %1 = vector.load %arg2[%c0_1, %c0_2] : memref<32x128xbf16, #tpu.memory_space<vmem>>, vector<32x128xbf16>
    %cst = arith.constant dense<0.000000e+00> : vector<8x128xf32>
    %2 = tpu.matmul %0, %1, %cst {dimension_numbers = #tpu.dot_dimension_numbers<[1], [0], [0], [1], [0, 0, 1, 1], [], []>} : vector<8x32xbf16>, vector<32x128xbf16>, vector<8x128xf32> -> vector<8x128xf32>
    %c0_3 = arith.constant 0 : index
    %c0_4 = arith.constant 0 : index
    %3 = vector.load %arg3[%c0_3, %c0_4] : memref<1x128xf32, #tpu.memory_space<vmem>>, vector<1x128xf32>
    %4 = vector.broadcast %3 : vector<1x128xf32> to vector<8x128xf32>
    %5 = arith.addf %2, %4 : vector<8x128xf32>
    %cst_5 = arith.constant dense<0xFF800000> : vector<8xf32>
    %6 = vector.multi_reduction <maximumf>, %5, %cst_5 [1] : vector<8x128xf32> to vector<8xf32>
    %7 = vector.shape_cast %6 : vector<8xf32> to vector<8x1xf32>
    %8 = vector.broadcast %7 : vector<8x1xf32> to vector<8x128xf32>
    %9 = arith.subf %5, %8 : vector<8x128xf32>
    %10 = math.exp %9 : vector<8x128xf32>
    %cst_6 = arith.constant dense<0.000000e+00> : vector<8xf32>
    %11 = vector.multi_reduction <add>, %10, %cst_6 [1] : vector<8x128xf32> to vector<8xf32>
    %12 = vector.shape_cast %11 : vector<8xf32> to vector<8x1xf32>
    %13 = math.log %12 : vector<8x1xf32>
    %14 = vector.broadcast %13 : vector<8x1xf32> to vector<8x128xf32>
    %15 = arith.subf %9, %14 : vector<8x128xf32>
    %c0_7 = arith.constant 0 : index
    %c0_8 = arith.constant 0 : index
    %16 = vector.load %arg4[%c0_7, %c0_8] : memref<8x128xf32, #tpu.memory_space<vmem>>, vector<8x128xf32>
    tpu.vector_store %arg4[%c0_7, %c0_8], %15 {strides = array<i32>} : memref<8x128xf32, #tpu.memory_space<vmem>>, vector<8x128xf32>,
    return
  }
  func.func @transform_0(%arg0: i32) -> (i32, i32) {
    %c0_i32 = arith.constant 0 : i32
    %c0_i32_0 = arith.constant 0 : i32
    return %arg0, %c0_i32 : i32, i32
  }
  func.func @transform_1(%arg0: i32) -> (i32, i32) {
    %c0_i32 = arith.constant 0 : i32
    %c0_i32_0 = arith.constant 0 : i32
    %c0_i32_1 = arith.constant 0 : i32
    return %c0_i32, %c0_i32_0 : i32, i32
  }
  func.func @transform_2(%arg0: i32) -> (i32, i32) {
    %c0_i32 = arith.constant 0 : i32
    %c0_i32_0 = arith.constant 0 : i32
    %c0_i32_1 = arith.constant 0 : i32
    return %c0_i32, %c0_i32_0 : i32, i32
  }
  func.func @transform_3(%arg0: i32) -> (i32, i32) {
    %c0_i32 = arith.constant 0 : i32
    %c0_i32_0 = arith.constant 0 : i32
    return %arg0, %c0_i32 : i32, i32
  }
}

module attributes {stable_mosaic.version = 11 : i64} {
  func.func @ctc_head_kernel(%arg0: i32, %arg1: memref<8x32xbf16, #tpu.memory_space<vmem>>, %arg2: memref<32x128xbf16, #tpu.memory_space<vmem>>, %arg3: memref<1x128xf32, #tpu.memory_space<vmem>>, %arg4: memref<8x128xf32, #tpu.memory_space<vmem>>) attributes {dimension_semantics = [#tpu.dimension_semantics<parallel>], iteration_bounds = array<i64: 2>, scalar_prefetch = 0 : i64, scratch_operands = 0 : i64, tpu.core_type = #tpu.core_type<tc>, window_params = [{transform_indices = @transform_0, window_bounds = array<i64: 8, 32>}, {pipeline_mode = #tpu.pipeline_mode<synchronous>, transform_indices = @transform_1, window_bounds = array<i64: 32, 128>}, {pipeline_mode = #tpu.pipeline_mode<synchronous>, transform_indices = @transform_2, window_bounds = array<i64: 1, 128>}, {transform_indices = @transform_3, window_bounds = array<i64: 8, 128>}]} {
    %c0 = arith.constant 0 : index
    %c0_0 = arith.constant 0 : index
    %0 = vector.load %arg1[%c0, %c0_0] : memref<8x32xbf16, #tpu.memory_space<vmem>>, vector<8x32xbf16>
    %c0_1 = arith.constant 0 : index
    %c0_2 = arith.constant 0 : index
    %1 = vector.load %arg2[%c0_1, %c0_2] : memref<32x128xbf16, #tpu.memory_space<vmem>>, vector<32x128xbf16>
    %cst = arith.constant dense<0.000000e+00> : vector<8x128xf32>
    %2 = tpu.matmul %0, %1, %cst {dimension_numbers = #tpu.dot_dimension_numbers<[1], [0], [0], [1], [0, 0, 1, 1], [], []>} : vector<8x32xbf16>, vector<32x128xbf16>, vector<8x128xf32> -> vector<8x128xf32>
    %c0_3 = arith.constant 0 : index
    %c0_4 = arith.constant 0 : index
    %3 = vector.load %arg3[%c0_3, %c0_4] : memref<1x128xf32, #tpu.memory_space<vmem>>, vector<1x128xf32>
    %4 = vector.broadcast %3 : vector<1x128xf32> to vector<8x128xf32>
    %5 = arith.addf %2, %4 : vector<8x128xf32>
    %cst_5 = arith.constant dense<0xFF800000> : vector<8xf32>
    %6 = vector.multi_reduction <maximumf>, %5, %cst_5 [1] : vector<8x128xf32> to vector<8xf32>
    %7 = vector.shape_cast %6 : vector<8xf32> to vector<8x1xf32>
    %8 = vector.broadcast %7 : vector<8x1xf32> to vector<8x128xf32>
    %9 = arith.subf %5, %8 : vector<8x128xf32>
    %10 = math.exp %9 : vector<8x128xf32>
    %cst_6 = arith.constant dense<0.000000e+00> : vector<8xf32>
    %11 = vector.multi_reduction <add>, %10, %cst_6 [1] : vector<8x128xf32> to vector<8xf32>
    %12 = vector.shape_cast %11 : vector<8xf32> to vector<8x1xf32>
    %13 = math.log %12 : vector<8x1xf32>
    %14 = vector.broadcast %13 : vector<8x1xf32> to vector<8x128xf32>
    %15 = arith.subf %9, %14 : vector<8x128xf32>
    %c0_7 = arith.constant 0 : index
    %c0_8 = arith.constant 0 : index
    %16 = vector.load %arg4[%c0_7, %c0_8] : memref<8x128xf32, #tpu.memory_space<vmem>>, vector<8x128xf32>
    tpu.vector_store %arg4[%c0_7, %c0_8], %15 {strides = array<i32>} : memref<8x128xf32, #tpu.memory_space<vmem>>, vector<8x128xf32>,
    return
  }
  func.func @transform_0(%arg0: i32) -> (i32, i32) {
    %c0_i32 = arith.constant 0 : i32
    %c0_i32_0 = arith.constant 0 : i32
    return %arg0, %c0_i32 : i32, i32
  }
  func.func @transform_1(%arg0: i32) -> (i32, i32) {
    %c0_i32 = arith.constant 0 : i32
    %c0_i32_0 = arith.constant 0 : i32
    %c0_i32_1 = arith.constant 0 : i32
    return %c0_i32, %c0_i32_0 : i32, i32
  }
  func.func @transform_2(%arg0: i32) -> (i32, i32) {
    %c0_i32 = arith.constant 0 : i32
    %c0_i32_0 = arith.constant 0 : i32
    %c0_i32_1 = arith.constant 0 : i32
    return %c0_i32, %c0_i32_0 : i32, i32
  }
  func.func @transform_3(%arg0: i32) -> (i32, i32) {
    %c0_i32 = arith.constant 0 : i32
    %c0_i32_0 = arith.constant 0 : i32
    return %arg0, %c0_i32 : i32, i32
  }
}

</mosaic_0001>

<llo_original>
// kernel: tpu_custom_call.1
$region0: #{tpu_custom_call.1}
  #allocation0 [shape = 'u32[]', space=smem, size = 0x4, offset = 0x4, fixed_abs, tag = 'smem constant byte address 0x4 - core index']
  #allocation1 [shape = 'u32[144,128]{1,0:T(1,128)}', space=vmem, size = 0x12000, scoped, tag = 'internal scratch']
  %s0 = inlined_call_operand.hbm [shape: bf16[16,32], index: 0, kind: input, shape index: {}]
  %s1 = inlined_call_operand.hbm [shape: bf16[32,128], index: 1, kind: input, shape index: {}]
  %s2 = inlined_call_operand.vmem [shape: f32[1,128], index: 2, kind: input, shape index: {}]
  %s3 = inlined_call_operand.hbm [shape: f32[16,128], index: 3, kind: output, shape index: {}]
  %s4 = sld [smem:[#allocation0]]
  $region53: #{tpu_custom_call.1} parent=0
    _
  %s6 = ssub.s32 1, %s4
  %s7 = scalar_select 0, %s6, %s4
  $region1: #{tpu_custom_call.1} parent=0
    #allocation2 [shape = 'u8[4096]{0}', space=vmem, size = 0x1000, scoped, tag = 'input window, operand 0']
    #allocation3 [shape = 's32[2]{0}', space=sflag, size = 0x8, scoped, tag = 'scoped memory for tpu_custom_call.1']
    #allocation4 [shape = 's32[2]{0}', space=sflag, size = 0x8, scoped, tag = 'scoped memory for tpu_custom_call.1']
    #allocation5 [shape = 'u8[8192]{0}', space=vmem, size = 0x2000, scoped, tag = 'input window, operand 1, single buffered']
    #allocation6 [shape = 's32[1]{0}', space=sflag, size = 0x4, scoped, tag = 'scoped memory for tpu_custom_call.1']
    #allocation7 [shape = 'u8[8192]{0}', space=vmem, size = 0x2000, scoped, tag = 'output window, operand 0']
    %8 = vsyncpa [#allocation3], 0
    %s9 = scalar_lea.sflag [#allocation3], 1
    %10 = vsyncpa %s9, 0
    %11 = vsyncpa [#allocation6], 0
    %12 = vsyncpa [#allocation4], 0
    %s13 = scalar_lea.sflag [#allocation4], 1
    %14 = vsyncpa %s13, 0
    loop: start=0, step=1, limit=4
    $region2: #{tpu_custom_call.1} parent=1 // loop_pre_header
      _
    $region3: #{tpu_custom_call.1} parent=1 // loop_header
      %s16 = sphi 0, %s20
      %p17 = scmp.ge.s32.totalorder %s16, 4
      %s26 = sphi 0, %s28
      %s29 = sphi 0, %s26
      %s30 = sphi 0, %s29
      %s46 = sphi 0, %s30
      %s50 = sphi 0, %s50
      %s52 = sphi 0, %s50
      %s53 = sphi 0, %s52
      %s67 = sphi 0, %s53
      %s71 = sphi 0, %s71
      %s73 = sphi 0, %s71
      %s74 = sphi 0, %s73
      %s88 = sphi 0, %s74
      %s94 = sphi 0, %s96
      %s97 = sphi 0, %s94
      %s98 = sphi 0, %s97
      %s114 = sphi 0, %s98
    $region4: #{tpu_custom_call.1} parent=1 // loop_header_branch
      %19 = sbr.rel (%p17) target = $region8
    $region5: #{tpu_custom_call.1} parent=1 // loop_body
      %s21 = ssub.s32 %s16, 1
      %s22 = ssub.s32 %s16, 2
      %s23 = sadd.s32 %s16, 1
      %s24 = ssub.s32 %s16, %s23
      %p25 = scmp.eq.s32.totalorder %s24, 0
      %s27 = sadd.s32 %s26, 1
      %s28 = scalar_select %p25, %s26, %s27
      %p31 = pneg %p25
      %p32 = scmp.eq.s32.totalorder %s16, 1
      %p33 = por %p31, %p32
      %p34 = scmp.ne.s32.totalorder %s26, %s29
      %p35 = scmp.eq.s32.totalorder %s16, 0
      %p36 = por %p34, %p35
      %p37 = scmp.ne.s32.totalorder %s26, %s29
      %p38 = scmp.eq.s32.totalorder %s21, 1
      %p39 = por %p37, %p38
      %p40 = scmp.ne.s32.totalorder %s29, %s30
      %p41 = scmp.eq.s32.totalorder %s21, 0
      %p42 = por %p40, %p41
      %p43 = scmp.ne.s32.totalorder %s29, %s30
      %p44 = scmp.eq.s32.totalorder %s22, 1
      %p45 = por %p43, %p44
      %p47 = scmp.ne.s32.totalorder %s30, %s46
      %p48 = scmp.eq.s32.totalorder %s22, 0
      %p49 = por %p47, %p48
      %s51 = sadd.s32 %s50, 1
      %p54 = scmp.eq.s32.totalorder %s16, 1
      %p55 = scmp.ne.s32.totalorder %s50, %s52
      %p56 = scmp.eq.s32.totalorder %s16, 0
      %p57 = por %p55, %p56
      %p58 = scmp.ne.s32.totalorder %s50, %s52
      %p59 = scmp.eq.s32.totalorder %s21, 1
      %p60 = por %p58, %p59
      %p61 = scmp.ne.s32.totalorder %s52, %s53
      %p62 = scmp.eq.s32.totalorder %s21, 0
      %p63 = por %p61, %p62
      %p64 = scmp.ne.s32.totalorder %s52, %s53
      %p65 = scmp.eq.s32.totalorder %s22, 1
      %p66 = por %p64, %p65
      %p68 = scmp.ne.s32.totalorder %s53, %s67
      %p69 = scmp.eq.s32.totalorder %s22, 0
      %p70 = por %p68, %p69
      %s72 = sadd.s32 %s71, 1
      %p75 = scmp.eq.s32.totalorder %s16, 1
      %p76 = scmp.ne.s32.totalorder %s71, %s73
      %p77 = scmp.eq.s32.totalorder %s16, 0
      %p78 = por %p76, %p77
      %p79 = scmp.ne.s32.totalorder %s71, %s73
      %p80 = scmp.eq.s32.totalorder %s21, 1
      %p81 = por %p79, %p80
      %p82 = scmp.ne.s32.totalorder %s73, %s74
      %p83 = scmp.eq.s32.totalorder %s21, 0
      %p84 = por %p82, %p83
      %p85 = scmp.ne.s32.totalorder %s73, %s74
      %p86 = scmp.eq.s32.totalorder %s22, 1
      %p87 = por %p85, %p86
      %p89 = scmp.ne.s32.totalorder %s74, %s88
      %p90 = scmp.eq.s32.totalorder %s22, 0
      %p91 = por %p89, %p90
      %s92 = ssub.s32 %s16, %s23
      %p93 = scmp.eq.s32.totalorder %s92, 0
      %s95 = sadd.s32 %s94, 1
      %s96 = scalar_select %p93, %s94, %s95
      %p99 = pneg %p93
      %p100 = scmp.eq.s32.totalorder %s16, 1
      %p101 = por %p99, %p100
      %p102 = scmp.ne.s32.totalorder %s94, %s97
      %p103 = scmp.eq.s32.totalorder %s16, 0
      %p104 = por %p102, %p103
      %p105 = scmp.ne.s32.totalorder %s94, %s97
      %p106 = scmp.eq.s32.totalorder %s21, 1
      %p107 = por %p105, %p106
      %p108 = scmp.ne.s32.totalorder %s97, %s98
      %p109 = scmp.eq.s32.totalorder %s21, 0
      %p110 = por %p108, %p109
      %p111 = scmp.ne.s32.totalorder %s97, %s98
      %p112 = scmp.eq.s32.totalorder %s22, 1
      %p113 = por %p111, %p112
      %p115 = scmp.ne.s32.totalorder %s98, %s114
      %p116 = scmp.eq.s32.totalorder %s22, 0
      %p117 = por %p115, %p116
      %p118 = scmp.le.s32.totalorder 1, %s16
      %p119 = scmp.lt.s32.totalorder %s16, 3
      %p120 = pnand %p118, %p119
      %p121 = pneg %p120
      // Predicated region
      $region9: #{tpu_custom_call.1} parent=5 // pred_check
        _
      $region10: #{tpu_custom_call.1} parent=5 // pred_check_branch
        %123 = sbr.rel (%p120) target = $region12
      $region11: #{tpu_custom_call.1} parent=5 // pred_region
        %s124 = ssub.s32 %s16, 1
        // Predicated region
        $region13: #{tpu_custom_call.1} parent=11 // pred_check
          %p125 = pneg %p63
        $region14: #{tpu_custom_call.1} parent=11 // pred_check_branch
          %127 = sbr.rel (%p125) target = $region16
        $region15: #{tpu_custom_call.1} parent=11 // pred_region
          %s129 = ssub.s32 256, 256
          %130 = vsyncadd [#allocation6], %s129
          %s131 = sshll.u32 [#allocation5], 4
          %s132 = int_to_ptr.vmem [resolvable:$true] %s131
          %137 = dma.hbm_to_vmem [thread:$0]  %s1, 256, %s132, [#allocation6], 64, 64, 4
        $region16: #{tpu_custom_call.1} parent=11 // pred_fallthru
          _
        // Predicated region
        $region17: #{tpu_custom_call.1} parent=11 // pred_check
          %p138 = pneg %p84
        $region18: #{tpu_custom_call.1} parent=11 // pred_check_branch
          %140 = sbr.rel (%p138) target = $region20
        $region19: #{tpu_custom_call.1} parent=11 // pred_region
          _
        $region20: #{tpu_custom_call.1} parent=11 // pred_fallthru
          _
      $region12: #{tpu_custom_call.1} parent=5 // pred_fallthru
        _
      %p141 = scmp.lt.s32.totalorder %s16, 2
      // Predicated region
      $region21: #{tpu_custom_call.1} parent=5 // pred_check
        %p142 = pneg %p141
      $region22: #{tpu_custom_call.1} parent=5 // pred_check_branch
        %144 = sbr.rel (%p142) target = $region24
      $region23: #{tpu_custom_call.1} parent=5 // pred_region
        // Predicated region
        $region25: #{tpu_custom_call.1} parent=23 // pred_check
          %p145 = pneg %p36
        $region26: #{tpu_custom_call.1} parent=23 // pred_check_branch
          %147 = sbr.rel (%p145) target = $region28
        $region27: #{tpu_custom_call.1} parent=23 // pred_region
          %s148 = sand.u32 %s26, 1
          %s149 = scalar_lea.sflag [#allocation3], %s148
          %s150 = sand.u32 %s26, 1
          %s151 = smul.addr %s150, 4
          %s152 = scalar_lea.vmem [#allocation2], %s151
          %s154 = ssub.s32 64, 64
          %155 = vsyncadd %s149, %s154
          %s156 = smul.addr %s16, 64
          %s157 = scalar_lea.hbm %s0, %s156
          %s159 = sshll.u32 %s152, 4
          %s160 = int_to_ptr.vmem [resolvable:$true] %s159
          %162 = dma.hbm_to_vmem [thread:$0]  %s157, 64, %s160, %s149
        $region28: #{tpu_custom_call.1} parent=23 // pred_fallthru
          _
      $region24: #{tpu_custom_call.1} parent=5 // pred_fallthru
        _
      %p163 = scmp.le.s32.totalorder 1, %s16
      %p164 = scmp.lt.s32.totalorder %s16, 3
      %p165 = pnand %p163, %p164
      %p166 = pneg %p165
      // Predicated region
      $region29: #{tpu_custom_call.1} parent=5 // pred_check
        _
      $region30: #{tpu_custom_call.1} parent=5 // pred_check_branch
        %168 = sbr.rel (%p165) target = $region32
      $region31: #{tpu_custom_call.1} parent=5 // pred_region
        %s169 = ssub.s32 %s16, 1
        %s170 = sand.u32 %s29, 1
        %s171 = scalar_lea.sflag [#allocation3], %s170
        %s172 = sand.u32 %s29, 1
        %s173 = smul.addr %s172, 4
        %s174 = scalar_lea.vmem [#allocation2], %s173
        // Predicated region
        $region33: #{tpu_custom_call.1} parent=31 // pred_check
          %p175 = pneg %p42
        $region34: #{tpu_custom_call.1} parent=31 // pred_check_branch
          %177 = sbr.rel (%p175) target = $region36
        $region35: #{tpu_custom_call.1} parent=31 // pred_region
          %178 = dma.done %s171, 64
        $region36: #{tpu_custom_call.1} parent=31 // pred_fallthru
          _
        // Predicated region
        $region37: #{tpu_custom_call.1} parent=31 // pred_check
          %p179 = pneg %p63
        $region38: #{tpu_custom_call.1} parent=31 // pred_check_branch
          %181 = sbr.rel (%p179) target = $region40
        $region39: #{tpu_custom_call.1} parent=31 // pred_region
          %182 = dma.done [#allocation6], 256
        $region40: #{tpu_custom_call.1} parent=31 // pred_fallthru
          _
        %s183 = sand.u32 %s29, 1
        %s184 = scalar_lea.sflag [#allocation3], %s183
        %s185 = sand.u32 %s29, 1
        %s186 = smul.addr %s185, 4
        %s187 = scalar_lea.vmem [#allocation2], %s186
        %p188 = pneg %p42
        %p189 = pneg %p39
        %p190 = pneg %p63
        %p191 = pneg %p60
        %p192 = pneg %p84
        %p193 = pneg %p81
        %p194 = pneg %p110
        %p195 = pneg %p107
        %s196 = sand.u32 %s97, 1
        %s197 = scalar_lea.sflag [#allocation4], %s196
        %s198 = sand.u32 %s97, 1
        %s199 = smul.addr %s198, 8
        %s200 = scalar_lea.vmem [#allocation7], %s199
        %v202 = vld [vmem:[%s174] sm:$0xf]
        %v203 = vld [vmem:[#allocation5] sm:$0xf]
        %v204 = vld [vmem:[#allocation5 + $0x4] sm:$0xf]
        %v205 = vld [vmem:[#allocation5 + $0x8] sm:$0xf]
        %v206 = vld [vmem:[#allocation5 + $0xc] sm:$0xf]
        %v207 = vld [vmem:[%s2] sm:$0x1]
        %v209 = vlaneseq
        %v210 = vshrl.u32 %v209, 7
        %v211 = vsub.s32 0, %v210
        %v212 = vrot.slane %v207, %v211
        %v218 = vunpack.c.l.b16 %v203
        %v219 = vunpack.c.l.b16 %v204
        %v220 = vunpack.c.l.b16 %v205
        %v221 = vunpack.c.l.b16 %v206
        %v222 = vpack.c.b16 %v219, %v218
        %v223 = vpack.c.b16 %v221, %v220
        %vm226 = vcmask 261120
        %v228 = vsel %vm226, %v202, 0
        %230 = vmatprep.subr.bf16.mxu0 0
        %231 = vmatpush1.bf16.msra.mxu0 %v222
        %232 = vmatprep.subr.bf16.mxu0 0
        %233 = vmatpush1.bf16.msra.mxu0 %v223
        %234 = vmatprep.subr.bf16.mxu0 0
        %235 = vmatpush1.bf16.msra.mxu0 0
        %236 = vmatprep.subr.bf16.mxu0 0
        %237 = vmatpush1.bf16.msra.mxu0 0
        %238 = vmatprep.subr.bf16.mxu0 0
        %239 = vmatpush1.bf16.msra.mxu0 0
        %240 = vmatprep.subr.bf16.mxu0 0
        %241 = vmatpush1.bf16.msra.mxu0 0
        %242 = vmatprep.subr.bf16.mxu0 0
        %243 = vmatpush1.bf16.msra.mxu0 0
        %244 = vmatprep.subr.bf16.mxu0 0
        %245 = vmatpush1.bf16.msra.mxu0 0
        %246 = vmatprep.subr.bf16.mxu0 0
        %247 = vmatpush1.bf16.msra.mxu0 0
        %248 = vmatprep.subr.bf16.mxu0 0
        %249 = vmatpush1.bf16.msra.mxu0 0
        %250 = vmatprep.subr.bf16.mxu0 0
        %251 = vmatpush1.bf16.msra.mxu0 0
        %252 = vmatprep.subr.bf16.mxu0 0
        %253 = vmatpush1.bf16.msra.mxu0 0
        %254 = vmatprep.subr.bf16.mxu0 0
        %255 = vmatpush1.bf16.msra.mxu0 0
        %256 = vmatprep.subr.bf16.mxu0 0
        %257 = vmatpush1.bf16.msra.mxu0 0
        %258 = vmatprep.subr.bf16.mxu0 0
        %259 = vmatpush1.bf16.msra.mxu0 0
        %260 = vmatprep.subr.bf16.mxu0 0
        %261 = vmatpush1.bf16.msra.mxu0 0
        %262 = vmatprep.mubr.bf16.mxu0 0
        %263 = vmatmul.mubr.bf16.gmra.mrb[0].mxu0 %v228
        %v264 = vpop.f32.mrb[0].mxu0
        %v265 = vadd.f32 %v212, %v264
        %v266 = vpop.f32.mrb[0].mxu0
        %v267 = vpop.f32.mrb[0].mxu0
        %v268 = vpop.f32.mrb[0].mxu0
        %269 = vdwg.mxu0
        %270 = vmax.xlane.f32.xlu0 %v265
        %v271 = vpop.xlane.xlu0 %270
        %v272 = vsub.f32 %v265, %v271
        %v273 = vmul.f32 %v272, 1.442695
        %v274 = vpow.pop %v273
        %275 = vadd.xlane.f32.xlu0 %v274
        %v276 = vpop.xlane.xlu0 %275
        %v277 = vlog2.pop %v276
        %v278 = vmul.f32 %v277, 0.6931472
        %v279 = vsub.f32 %v272, %v278
        %280 = vst [vmem:[%s200] sm:$0xff] %v279
        %s281 = sand.u32 %s97, 1
        %s282 = scalar_lea.sflag [#allocation4], %s281
        %s283 = sand.u32 %s97, 1
        %s284 = smul.addr %s283, 8
        %s285 = scalar_lea.vmem [#allocation7], %s284
        // Predicated region
        $region41: #{tpu_custom_call.1} parent=31 // pred_check
          %p286 = pneg %p107
        $region42: #{tpu_custom_call.1} parent=31 // pred_check_branch
          %288 = sbr.rel (%p286) target = $region44
        $region43: #{tpu_custom_call.1} parent=31 // pred_region
          %s290 = ssub.s32 128, 128
          %291 = vsyncadd %s282, %s290
          %s292 = smul.addr %s21, 128
          %s293 = scalar_lea.hbm %s3, %s292
          %s295 = sshll.u32 %s285, 4
          %s296 = int_to_ptr.vmem [resolvable:$true] %s295
          %298 = dma.vmem_to_hbm [thread:$0]  %s296, 128, %s293, %s282
        $region44: #{tpu_custom_call.1} parent=31 // pred_fallthru
          _
      $region32: #{tpu_custom_call.1} parent=5 // pred_fallthru
        _
      %p299 = scmp.le.s32.totalorder 2, %s16
      // Predicated region
      $region45: #{tpu_custom_call.1} parent=5 // pred_check
        %p300 = pneg %p299
      $region46: #{tpu_custom_call.1} parent=5 // pred_check_branch
        %302 = sbr.rel (%p300) target = $region48
      $region47: #{tpu_custom_call.1} parent=5 // pred_region
        %s303 = ssub.s32 %s16, 2
        // Predicated region
        $region49: #{tpu_custom_call.1} parent=47 // pred_check
          %p304 = pneg %p113
        $region50: #{tpu_custom_call.1} parent=47 // pred_check_branch
          %306 = sbr.rel (%p304) target = $region52
        $region51: #{tpu_custom_call.1} parent=47 // pred_region
          %s307 = sand.u32 %s98, 1
          %s308 = scalar_lea.sflag [#allocation4], %s307
          %s309 = sand.u32 %s98, 1
          %s310 = smul.addr %s309, 8
          %s311 = scalar_lea.vmem [#allocation7], %s310
          %312 = dma.done %s308, 128
        $region52: #{tpu_custom_call.1} parent=47 // pred_fallthru
          _
      $region48: #{tpu_custom_call.1} parent=5 // pred_fallthru
        _
    $region6: #{tpu_custom_call.1} parent=1 // loop_footer
      %s20 = sadd.s32 1, %s16
    $region7: #{tpu_custom_call.1} parent=1 // loop_footer_branch
      %15 = sbr.rel target = $region3
    $region8: #{tpu_custom_call.1} parent=1 // loop_exit
      _
    %313 = vsyncpa [#allocation3], 1
    %s314 = scalar_lea.sflag [#allocation3], 1
    %315 = vsyncpa %s314, 1
    %316 = vsyncpa [#allocation6], 1
    %317 = vsyncpa [#allocation4], 1
    %s318 = scalar_lea.sflag [#allocation4], 1
    %319 = vsyncpa %s318, 1

// kernel: tpu_custom_call.1
$region0: #{tpu_custom_call.1}
  #allocation0 [shape = 'u32[]', space=smem, size = 0x4, offset = 0x4, fixed_abs, tag = 'smem constant byte address 0x4 - core index']
  #allocation1 [shape = 'u32[144,128]{1,0:T(1,128)}', space=vmem, size = 0x12000, scoped, tag = 'internal scratch']
  %s0 = inlined_call_operand.hbm [shape: bf16[16,32], index: 0, kind: input, shape index: {}]
  %s1 = inlined_call_operand.hbm [shape: bf16[32,128], index: 1, kind: input, shape index: {}]
  %s2 = inlined_call_operand.vmem [shape: f32[1,128], index: 2, kind: input, shape index: {}]
  %s3 = inlined_call_operand.hbm [shape: f32[16,128], index: 3, kind: output, shape index: {}]
  %s4 = sld [smem:[#allocation0]]
  $region53: #{tpu_custom_call.1} parent=0
    _
  %s6 = ssub.s32 1, %s4
  %s7 = scalar_select 0, %s6, %s4
  $region1: #{tpu_custom_call.1} parent=0
    #allocation2 [shape = 'u8[4096]{0}', space=vmem, size = 0x1000, scoped, tag = 'input window, operand 0']
    #allocation3 [shape = 's32[2]{0}', space=sflag, size = 0x8, scoped, tag = 'scoped memory for tpu_custom_call.1']
    #allocation4 [shape = 's32[2]{0}', space=sflag, size = 0x8, scoped, tag = 'scoped memory for tpu_custom_call.1']
    #allocation5 [shape = 'u8[8192]{0}', space=vmem, size = 0x2000, scoped, tag = 'input window, operand 1, single buffered']
    #allocation6 [shape = 's32[1]{0}', space=sflag, size = 0x4, scoped, tag = 'scoped memory for tpu_custom_call.1']
    #allocation7 [shape = 'u8[8192]{0}', space=vmem, size = 0x2000, scoped, tag = 'output window, operand 0']
    %8 = vsyncpa [#allocation3], 0
    %s9 = scalar_lea.sflag [#allocation3], 1
    %10 = vsyncpa %s9, 0
    %11 = vsyncpa [#allocation6], 0
    %12 = vsyncpa [#allocation4], 0
    %s13 = scalar_lea.sflag [#allocation4], 1
    %14 = vsyncpa %s13, 0
    loop: start=0, step=1, limit=4
    $region2: #{tpu_custom_call.1} parent=1 // loop_pre_header
      _
    $region3: #{tpu_custom_call.1} parent=1 // loop_header
      %s16 = sphi 0, %s20
      %p17 = scmp.ge.s32.totalorder %s16, 4
      %s26 = sphi 0, %s28
      %s29 = sphi 0, %s26
      %s30 = sphi 0, %s29
      %s46 = sphi 0, %s30
      %s50 = sphi 0, %s50
      %s52 = sphi 0, %s50
      %s53 = sphi 0, %s52
      %s67 = sphi 0, %s53
      %s71 = sphi 0, %s71
      %s73 = sphi 0, %s71
      %s74 = sphi 0, %s73
      %s88 = sphi 0, %s74
      %s94 = sphi 0, %s96
      %s97 = sphi 0, %s94
      %s98 = sphi 0, %s97
      %s114 = sphi 0, %s98
    $region4: #{tpu_custom_call.1} parent=1 // loop_header_branch
      %19 = sbr.rel (%p17) target = $region8
    $region5: #{tpu_custom_call.1} parent=1 // loop_body
      %s21 = ssub.s32 %s16, 1
      %s22 = ssub.s32 %s16, 2
      %s23 = sadd.s32 %s16, 1
      %s24 = ssub.s32 %s16, %s23
      %p25 = scmp.eq.s32.totalorder %s24, 0
      %s27 = sadd.s32 %s26, 1
      %s28 = scalar_select %p25, %s26, %s27
      %p31 = pneg %p25
      %p32 = scmp.eq.s32.totalorder %s16, 1
      %p33 = por %p31, %p32
      %p34 = scmp.ne.s32.totalorder %s26, %s29
      %p35 = scmp.eq.s32.totalorder %s16, 0
      %p36 = por %p34, %p35
      %p37 = scmp.ne.s32.totalorder %s26, %s29
      %p38 = scmp.eq.s32.totalorder %s21, 1
      %p39 = por %p37, %p38
      %p40 = scmp.ne.s32.totalorder %s29, %s30
      %p41 = scmp.eq.s32.totalorder %s21, 0
      %p42 = por %p40, %p41
      %p43 = scmp.ne.s32.totalorder %s29, %s30
      %p44 = scmp.eq.s32.totalorder %s22, 1
      %p45 = por %p43, %p44
      %p47 = scmp.ne.s32.totalorder %s30, %s46
      %p48 = scmp.eq.s32.totalorder %s22, 0
      %p49 = por %p47, %p48
      %s51 = sadd.s32 %s50, 1
      %p54 = scmp.eq.s32.totalorder %s16, 1
      %p55 = scmp.ne.s32.totalorder %s50, %s52
      %p56 = scmp.eq.s32.totalorder %s16, 0
      %p57 = por %p55, %p56
      %p58 = scmp.ne.s32.totalorder %s50, %s52
      %p59 = scmp.eq.s32.totalorder %s21, 1
      %p60 = por %p58, %p59
      %p61 = scmp.ne.s32.totalorder %s52, %s53
      %p62 = scmp.eq.s32.totalorder %s21, 0
      %p63 = por %p61, %p62
      %p64 = scmp.ne.s32.totalorder %s52, %s53
      %p65 = scmp.eq.s32.totalorder %s22, 1
      %p66 = por %p64, %p65
      %p68 = scmp.ne.s32.totalorder %s53, %s67
      %p69 = scmp.eq.s32.totalorder %s22, 0
      %p70 = por %p68, %p69
      %s72 = sadd.s32 %s71, 1
      %p75 = scmp.eq.s32.totalorder %s16, 1
      %p76 = scmp.ne.s32.totalorder %s71, %s73
      %p77 = scmp.eq.s32.totalorder %s16, 0
      %p78 = por %p76, %p77
      %p79 = scmp.ne.s32.totalorder %s71, %s73
      %p80 = scmp.eq.s32.totalorder %s21, 1
      %p81 = por %p79, %p80
      %p82 = scmp.ne.s32.totalorder %s73, %s74
      %p83 = scmp.eq.s32.totalorder %s21, 0
      %p84 = por %p82, %p83
      %p85 = scmp.ne.s32.totalorder %s73, %s74
      %p86 = scmp.eq.s32.totalorder %s22, 1
      %p87 = por %p85, %p86
      %p89 = scmp.ne.s32.totalorder %s74, %s88
      %p90 = scmp.eq.s32.totalorder %s22, 0
      %p91 = por %p89, %p90
      %s92 = ssub.s32 %s16, %s23
      %p93 = scmp.eq.s32.totalorder %s92, 0
      %s95 = sadd.s32 %s94, 1
      %s96 = scalar_select %p93, %s94, %s95
      %p99 = pneg %p93
      %p100 = scmp.eq.s32.totalorder %s16, 1
      %p101 = por %p99, %p100
      %p102 = scmp.ne.s32.totalorder %s94, %s97
      %p103 = scmp.eq.s32.totalorder %s16, 0
      %p104 = por %p102, %p103
      %p105 = scmp.ne.s32.totalorder %s94, %s97
      %p106 = scmp.eq.s32.totalorder %s21, 1
      %p107 = por %p105, %p106
      %p108 = scmp.ne.s32.totalorder %s97, %s98
      %p109 = scmp.eq.s32.totalorder %s21, 0
      %p110 = por %p108, %p109
      %p111 = scmp.ne.s32.totalorder %s97, %s98
      %p112 = scmp.eq.s32.totalorder %s22, 1
      %p113 = por %p111, %p112
      %p115 = scmp.ne.s32.totalorder %s98, %s114
      %p116 = scmp.eq.s32.totalorder %s22, 0
      %p117 = por %p115, %p116
      %p118 = scmp.le.s32.totalorder 1, %s16
      %p119 = scmp.lt.s32.totalorder %s16, 3
      %p120 = pnand %p118, %p119
      %p121 = pneg %p120
      // Predicated region
      $region9: #{tpu_custom_call.1} parent=5 // pred_check
        _
      $region10: #{tpu_custom_call.1} parent=5 // pred_check_branch
        %123 = sbr.rel (%p120) target = $region12
      $region11: #{tpu_custom_call.1} parent=5 // pred_region
        %s124 = ssub.s32 %s16, 1
        // Predicated region
        $region13: #{tpu_custom_call.1} parent=11 // pred_check
          %p125 = pneg %p63
        $region14: #{tpu_custom_call.1} parent=11 // pred_check_branch
          %127 = sbr.rel (%p125) target = $region16
        $region15: #{tpu_custom_call.1} parent=11 // pred_region
          %s129 = ssub.s32 256, 256
          %130 = vsyncadd [#allocation6], %s129
          %s131 = sshll.u32 [#allocation5], 4
          %s132 = int_to_ptr.vmem [resolvable:$true] %s131
          %137 = dma.hbm_to_vmem [thread:$0]  %s1, 256, %s132, [#allocation6], 64, 64, 4
        $region16: #{tpu_custom_call.1} parent=11 // pred_fallthru
          _
        // Predicated region
        $region17: #{tpu_custom_call.1} parent=11 // pred_check
          %p138 = pneg %p84
        $region18: #{tpu_custom_call.1} parent=11 // pred_check_branch
          %140 = sbr.rel (%p138) target = $region20
        $region19: #{tpu_custom_call.1} parent=11 // pred_region
          _
        $region20: #{tpu_custom_call.1} parent=11 // pred_fallthru
          _
      $region12: #{tpu_custom_call.1} parent=5 // pred_fallthru
        _
      %p141 = scmp.lt.s32.totalorder %s16, 2
      // Predicated region
      $region21: #{tpu_custom_call.1} parent=5 // pred_check
        %p142 = pneg %p141
      $region22: #{tpu_custom_call.1} parent=5 // pred_check_branch
        %144 = sbr.rel (%p142) target = $region24
      $region23: #{tpu_custom_call.1} parent=5 // pred_region
        // Predicated region
        $region25: #{tpu_custom_call.1} parent=23 // pred_check
          %p145 = pneg %p36
        $region26: #{tpu_custom_call.1} parent=23 // pred_check_branch
          %147 = sbr.rel (%p145) target = $region28
        $region27: #{tpu_custom_call.1} parent=23 // pred_region
          %s148 = sand.u32 %s26, 1
          %s149 = scalar_lea.sflag [#allocation3], %s148
          %s150 = sand.u32 %s26, 1
          %s151 = smul.addr %s150, 4
          %s152 = scalar_lea.vmem [#allocation2], %s151
          %s154 = ssub.s32 64, 64
          %155 = vsyncadd %s149, %s154
          %s156 = smul.addr %s16, 64
          %s157 = scalar_lea.hbm %s0, %s156
          %s159 = sshll.u32 %s152, 4
          %s160 = int_to_ptr.vmem [resolvable:$true] %s159
          %162 = dma.hbm_to_vmem [thread:$0]  %s157, 64, %s160, %s149
        $region28: #{tpu_custom_call.1} parent=23 // pred_fallthru
          _
      $region24: #{tpu_custom_call.1} parent=5 // pred_fallthru
        _
      %p163 = scmp.le.s32.totalorder 1, %s16
      %p164 = scmp.lt.s32.totalorder %s16, 3
      %p165 = pnand %p163, %p164
      %p166 = pneg %p165
      // Predicated region
      $region29: #{tpu_custom_call.1} parent=5 // pred_check
        _
      $region30: #{tpu_custom_call.1} parent=5 // pred_check_branch
        %168 = sbr.rel (%p165) target = $region32
      $region31: #{tpu_custom_call.1} parent=5 // pred_region
        %s169 = ssub.s32 %s16, 1
        %s170 = sand.u32 %s29, 1
        %s171 = scalar_lea.sflag [#allocation3], %s170
        %s172 = sand.u32 %s29, 1
        %s173 = smul.addr %s172, 4
        %s174 = scalar_lea.vmem [#allocation2], %s173
        // Predicated region
        $region33: #{tpu_custom_call.1} parent=31 // pred_check
          %p175 = pneg %p42
        $region34: #{tpu_custom_call.1} parent=31 // pred_check_branch
          %177 = sbr.rel (%p175) target = $region36
        $region35: #{tpu_custom_call.1} parent=31 // pred_region
          %178 = dma.done %s171, 64
        $region36: #{tpu_custom_call.1} parent=31 // pred_fallthru
          _
        // Predicated region
        $region37: #{tpu_custom_call.1} parent=31 // pred_check
          %p179 = pneg %p63
        $region38: #{tpu_custom_call.1} parent=31 // pred_check_branch
          %181 = sbr.rel (%p179) target = $region40
        $region39: #{tpu_custom_call.1} parent=31 // pred_region
          %182 = dma.done [#allocation6], 256
        $region40: #{tpu_custom_call.1} parent=31 // pred_fallthru
          _
        %s183 = sand.u32 %s29, 1
        %s184 = scalar_lea.sflag [#allocation3], %s183
        %s185 = sand.u32 %s29, 1
        %s186 = smul.addr %s185, 4
        %s187 = scalar_lea.vmem [#allocation2], %s186
        %p188 = pneg %p42
        %p189 = pneg %p39
        %p190 = pneg %p63
        %p191 = pneg %p60
        %p192 = pneg %p84
        %p193 = pneg %p81
        %p194 = pneg %p110
        %p195 = pneg %p107
        %s196 = sand.u32 %s97, 1
        %s197 = scalar_lea.sflag [#allocation4], %s196
        %s198 = sand.u32 %s97, 1
        %s199 = smul.addr %s198, 8
        %s200 = scalar_lea.vmem [#allocation7], %s199
        %v202 = vld [vmem:[%s174] sm:$0xf]
        %v203 = vld [vmem:[#allocation5] sm:$0xf]
        %v204 = vld [vmem:[#allocation5 + $0x4] sm:$0xf]
        %v205 = vld [vmem:[#allocation5 + $0x8] sm:$0xf]
        %v206 = vld [vmem:[#allocation5 + $0xc] sm:$0xf]
        %v207 = vld [vmem:[%s2] sm:$0x1]
        %v209 = vlaneseq
        %v210 = vshrl.u32 %v209, 7
        %v211 = vsub.s32 0, %v210
        %v212 = vrot.slane %v207, %v211
        %v218 = vunpack.c.l.b16 %v203
        %v219 = vunpack.c.l.b16 %v204
        %v220 = vunpack.c.l.b16 %v205
        %v221 = vunpack.c.l.b16 %v206
        %v222 = vpack.c.b16 %v219, %v218
        %v223 = vpack.c.b16 %v221, %v220
        %vm226 = vcmask 261120
        %v228 = vsel %vm226, %v202, 0
        %230 = vmatprep.subr.bf16.mxu0 0
        %231 = vmatpush1.bf16.msra.mxu0 %v222
        %232 = vmatprep.subr.bf16.mxu0 0
        %233 = vmatpush1.bf16.msra.mxu0 %v223
        %234 = vmatprep.subr.bf16.mxu0 0
        %235 = vmatpush1.bf16.msra.mxu0 0
        %236 = vmatprep.subr.bf16.mxu0 0
        %237 = vmatpush1.bf16.msra.mxu0 0
        %238 = vmatprep.subr.bf16.mxu0 0
        %239 = vmatpush1.bf16.msra.mxu0 0
        %240 = vmatprep.subr.bf16.mxu0 0
        %241 = vmatpush1.bf16.msra.mxu0 0
        %242 = vmatprep.subr.bf16.mxu0 0
        %243 = vmatpush1.bf16.msra.mxu0 0
        %244 = vmatprep.subr.bf16.mxu0 0
        %245 = vmatpush1.bf16.msra.mxu0 0
        %246 = vmatprep.subr.bf16.mxu0 0
        %247 = vmatpush1.bf16.msra.mxu0 0
        %248 = vmatprep.subr.bf16.mxu0 0
        %249 = vmatpush1.bf16.msra.mxu0 0
        %250 = vmatprep.subr.bf16.mxu0 0
        %251 = vmatpush1.bf16.msra.mxu0 0
        %252 = vmatprep.subr.bf16.mxu0 0
        %253 = vmatpush1.bf16.msra.mxu0 0
        %254 = vmatprep.subr.bf16.mxu0 0
        %255 = vmatpush1.bf16.msra.mxu0 0
        %256 = vmatprep.subr.bf16.mxu0 0
        %257 = vmatpush1.bf16.msra.mxu0 0
        %258 = vmatprep.subr.bf16.mxu0 0
        %259 = vmatpush1.bf16.msra.mxu0 0
        %260 = vmatprep.subr.bf16.mxu0 0
        %261 = vmatpush1.bf16.msra.mxu0 0
        %262 = vmatprep.mubr.bf16.mxu0 0
        %263 = vmatmul.mubr.bf16.gmra.mrb[0].mxu0 %v228
        %v264 = vpop.f32.mrb[0].mxu0
        %v265 = vadd.f32 %v212, %v264
        %v266 = vpop.f32.mrb[0].mxu0
        %v267 = vpop.f32.mrb[0].mxu0
        %v268 = vpop.f32.mrb[0].mxu0
        %269 = vdwg.mxu0
        %270 = vmax.xlane.f32.xlu0 %v265
        %v271 = vpop.xlane.xlu0 %270
        %v272 = vsub.f32 %v265, %v271
        %v273 = vmul.f32 %v272, 1.442695
        %v274 = vpow.pop %v273
        %275 = vadd.xlane.f32.xlu0 %v274
        %v276 = vpop.xlane.xlu0 %275
        %v277 = vlog2.pop %v276
        %v278 = vmul.f32 %v277, 0.6931472
        %v279 = vsub.f32 %v272, %v278
        %280 = vst [vmem:[%s200] sm:$0xff] %v279
        %s281 = sand.u32 %s97, 1
        %s282 = scalar_lea.sflag [#allocation4], %s281
        %s283 = sand.u32 %s97, 1
        %s284 = smul.addr %s283, 8
        %s285 = scalar_lea.vmem [#allocation7], %s284
        // Predicated region
        $region41: #{tpu_custom_call.1} parent=31 // pred_check
          %p286 = pneg %p107
        $region42: #{tpu_custom_call.1} parent=31 // pred_check_branch
          %288 = sbr.rel (%p286) target = $region44
        $region43: #{tpu_custom_call.1} parent=31 // pred_region
          %s290 = ssub.s32 128, 128
          %291 = vsyncadd %s282, %s290
          %s292 = smul.addr %s21, 128
          %s293 = scalar_lea.hbm %s3, %s292
          %s295 = sshll.u32 %s285, 4
          %s296 = int_to_ptr.vmem [resolvable:$true] %s295
          %298 = dma.vmem_to_hbm [thread:$0]  %s296, 128, %s293, %s282
        $region44: #{tpu_custom_call.1} parent=31 // pred_fallthru
          _
      $region32: #{tpu_custom_call.1} parent=5 // pred_fallthru
        _
      %p299 = scmp.le.s32.totalorder 2, %s16
      // Predicated region
      $region45: #{tpu_custom_call.1} parent=5 // pred_check
        %p300 = pneg %p299
      $region46: #{tpu_custom_call.1} parent=5 // pred_check_branch
        %302 = sbr.rel (%p300) target = $region48
      $region47: #{tpu_custom_call.1} parent=5 // pred_region
        %s303 = ssub.s32 %s16, 2
        // Predicated region
        $region49: #{tpu_custom_call.1} parent=47 // pred_check
          %p304 = pneg %p113
        $region50: #{tpu_custom_call.1} parent=47 // pred_check_branch
          %306 = sbr.rel (%p304) target = $region52
        $region51: #{tpu_custom_call.1} parent=47 // pred_region
          %s307 = sand.u32 %s98, 1
          %s308 = scalar_lea.sflag [#allocation4], %s307
          %s309 = sand.u32 %s98, 1
          %s310 = smul.addr %s309, 8
          %s311 = scalar_lea.vmem [#allocation7], %s310
          %312 = dma.done %s308, 128
        $region52: #{tpu_custom_call.1} parent=47 // pred_fallthru
          _
      $region48: #{tpu_custom_call.1} parent=5 // pred_fallthru
        _
    $region6: #{tpu_custom_call.1} parent=1 // loop_footer
      %s20 = sadd.s32 1, %s16
    $region7: #{tpu_custom_call.1} parent=1 // loop_footer_branch
      %15 = sbr.rel target = $region3
    $region8: #{tpu_custom_call.1} parent=1 // loop_exit
      _
    %313 = vsyncpa [#allocation3], 1
    %s314 = scalar_lea.sflag [#allocation3], 1
    %315 = vsyncpa %s314, 1
    %316 = vsyncpa [#allocation6], 1
    %317 = vsyncpa [#allocation4], 1
    %s318 = scalar_lea.sflag [#allocation4], 1
    %319 = vsyncpa %s318, 1

</llo_original>
